<compile_context>
chip_gen: v5e
topology: v5e:2x2
jax: 0.10.0
libtpu: 0.0.40
codegen_flags: <defaults>
</compile_context>

<pallas_src>
import functools

import jax
import jax.numpy as jnp
import numpy as np
from jax.experimental import pallas as pl
from jax.experimental.pallas import tpu as pltpu


# ----------------------------- Pallas kernels -------------------------------
# Tiled matmul: grid = (M/tm, N/tn, K/tk), K innermost (reduction). The f32
# accumulator lives in VMEM scratch; the epilogue runs once, on the last K step.

def _mm_bias_kernel(x_ref, w_ref, bias_ref, o_ref, acc_ref, *, relu):
    k = pl.program_id(2)

    @pl.when(k == 0)
    def _():
        acc_ref[...] = jnp.zeros_like(acc_ref)

    acc_ref[...] += jnp.dot(x_ref[...], w_ref[...],
                            preferred_element_type=jnp.float32)

    @pl.when(k == pl.num_programs(2) - 1)
    def _():
        out = acc_ref[...] + bias_ref[...]
        if relu:
            out = jnp.maximum(out, 0.0)
        o_ref[...] = out.astype(o_ref.dtype)


def _mm_bias_res_kernel(x_ref, w_ref, bias_ref, res_ref, o_ref, acc_ref, *, relu):
    k = pl.program_id(2)

    @pl.when(k == 0)
    def _():
        acc_ref[...] = jnp.zeros_like(acc_ref)

    acc_ref[...] += jnp.dot(x_ref[...], w_ref[...],
                            preferred_element_type=jnp.float32)

    @pl.when(k == pl.num_programs(2) - 1)
    def _():
        out = acc_ref[...] + bias_ref[...] + res_ref[...]
        if relu:
            out = jnp.maximum(out, 0.0)
        o_ref[...] = out.astype(o_ref.dtype)


# ------------------------------ Pallas wrapper -------------------------------

def _round_up(x, m):
    return (x + m - 1) // m * m


def _pad_to(a, shape):
    pads = tuple((0, s - d) for d, s in zip(a.shape, shape))
    if any(p[1] for p in pads):
        a = jnp.pad(a, pads)
    return a


def fused_matmul(x2d, w2d, bias, residual2d=None, *, relu,
                 tm_max=512, tn_max=256, tk_max=512):
    """act((x2d @ w2d) + bias (+ residual2d)), computed as a tiled MXU GEMM.

    - MXU operands are cast to bf16; accumulation and epilogue stay in f32.
    - Cout is padded to a multiple of 128 so output stores are lane-dense.
    - Tile caps (tm<=512, tn<=256, tk<=512 => ~5-6 MiB of VMEM with double
      buffering) fit v7x's 64 MiB VMEM; v6e/v5e (128 MiB) could raise tm/tk.
    """
    M, K = x2d.shape
    K2, N = w2d.shape
    assert K == K2 and bias.shape == (N,)

    tm = min(_round_up(M, 128), tm_max)
    tn = min(_round_up(N, 128), tn_max)
    tk = min(_round_up(K, 128), tk_max)
    Mp, Np, Kp = _round_up(M, tm), _round_up(N, tn), _round_up(K, tk)

    xp = _pad_to(x2d.astype(jnp.bfloat16), (Mp, Kp))
    wp = _pad_to(w2d.astype(jnp.bfloat16), (Kp, Np))
    bp = _pad_to(bias.reshape(1, N).astype(jnp.float32), (1, Np))

    x_spec = pl.BlockSpec((tm, tk), lambda i, j, k: (i, k))
    w_spec = pl.BlockSpec((tk, tn), lambda i, j, k: (k, j))
    b_spec = pl.BlockSpec((1, tn), lambda i, j, k: (0, j))
    o_spec = pl.BlockSpec((tm, tn), lambda i, j, k: (i, j))

    if residual2d is None:
        kernel = functools.partial(_mm_bias_kernel, relu=relu)
        in_specs = [x_spec, w_spec, b_spec]
        operands = (xp, wp, bp)
        extra_bytes = 0
    else:
        rp = _pad_to(residual2d.astype(jnp.float32), (Mp, Np))
        kernel = functools.partial(_mm_bias_res_kernel, relu=relu)
        r_spec = pl.BlockSpec((tm, tn), lambda i, j, k: (i, j))
        in_specs = [x_spec, w_spec, b_spec, r_spec]
        operands = (xp, wp, bp, rp)
        extra_bytes = rp.size * 4

    cost = pl.CostEstimate(
        flops=2 * Mp * Np * Kp,
        transcendentals=0,
        bytes_accessed=xp.size * 2 + wp.size * 2 + Mp * Np * 4 + extra_bytes)

    out = pl.pallas_call(
        kernel,
        out_shape=jax.ShapeDtypeStruct((Mp, Np), jnp.float32),
        grid_spec=pltpu.PrefetchScalarGridSpec(
            num_scalar_prefetch=0,
            grid=(Mp // tm, Np // tn, Kp // tk),
            in_specs=in_specs,
            out_specs=o_spec,
            scratch_shapes=[pltpu.VMEM((tm, tn), jnp.float32)]),
        compiler_params=pltpu.CompilerParams(
            dimension_semantics=("parallel", "parallel", "arbitrary"),
            vmem_limit_bytes=32 * 1024 * 1024),
        cost_estimate=cost,
    )(*operands)
    return out[:M, :N]


# ------------------------------- JAX glue ------------------------------------

def im2col(x_nhwc, kh, kw, stride, padding):
    """[N,H,W,C] -> ([N*Ho*Wo, kh*kw*C], (N,Ho,Wo)); column order (kh,kw,Cin)."""
    N, H, W, C = x_nhwc.shape
    xp = jnp.pad(x_nhwc, ((0, 0), (padding, padding), (padding, padding), (0, 0)))
    Ho = (H + 2 * padding - kh) // stride + 1
    Wo = (W + 2 * padding - kw) // stride + 1
    patches = []
    for i in range(kh):
        for j in range(kw):
            patches.append(
                xp[:, i:i + (Ho - 1) * stride + 1:stride,
                      j:j + (Wo - 1) * stride + 1:stride, :])
    cols = jnp.concatenate(patches, axis=-1)          # [N,Ho,Wo,kh*kw*C]
    return cols.reshape(N * Ho * Wo, kh * kw * C), (N, Ho, Wo)


def fold_bn(gamma, beta, mean, var, eps=1e-5):
    scale = gamma / jnp.sqrt(var + eps)
    bias = beta - mean * scale
    return scale, bias


def torch_w_to_mat(w_oihw):
    """[Cout,Cin,KH,KW] -> [KH*KW*Cin, Cout] matching the im2col column order."""
    return jnp.transpose(w_oihw, (2, 3, 1, 0)).reshape(-1, w_oihw.shape[0])


def basic_block_forward(x_nchw, params, *, stride):
    """Pallas implementation of BasicBlock.forward (inference-mode BN)."""
    x = jnp.transpose(x_nchw, (0, 2, 3, 1)).astype(jnp.float32)   # NCHW -> NHWC
    N, H, W, Cin = x.shape
    planes = params["w1"].shape[0]

    # conv1: Conv2dBNReLU(3x3, stride, pad=1); BN scale folded into the weights.
    s1, b1 = fold_bn(*params["bn1"])
    w1 = torch_w_to_mat(params["w1"]) * s1[None, :]
    cols1, (n1, ho1, wo1) = im2col(x, 3, 3, stride, 1)
    out1 = fused_matmul(cols1, w1, b1, relu=True)                 # [M, planes]
    out1_nhwc = out1.reshape(n1, ho1, wo1, planes)

    # conv2: Conv2dBN(3x3, 1, pad=1) + shortcut + ReLU, one fused Pallas GEMM.
    s2, b2 = fold_bn(*params["bn2"])
    w2 = torch_w_to_mat(params["w2"]) * s2[None, :]
    cols2, _ = im2col(out1_nhwc, 3, 3, 1, 1)

    if stride != 1 or Cin != planes:
        # Projection shortcut (1x1 conv + BN): fold into the same GEMM by
        # concatenating operand/weights along K; biases simply add.
        s_sc, b_sc = fold_bn(*params["bn_sc"])
        w_sc = torch_w_to_mat(params["w_sc"]) * s_sc[None, :]
        x_sub = x[:, ::stride, ::stride, :].reshape(-1, Cin)
        lhs = jnp.concatenate([cols2, x_sub], axis=1)
        rhs = jnp.concatenate([w2, w_sc], axis=0)
        out = fused_matmul(lhs, rhs, b2 + b_sc, relu=True)
    else:
        # Identity shortcut: residual added in the kernel epilogue (no extra
        # HBM round trip of a separate shortcut tensor through another kernel).
        out = fused_matmul(cols2, w2, b2,
                           residual2d=x.reshape(-1, Cin), relu=True)

    out_nhwc = out.reshape(n1, ho1, wo1, planes)
    return jnp.transpose(out_nhwc, (0, 3, 1, 2))                  # NHWC -> NCHW


# --------------------------- pure-JAX reference -------------------------------

def _conv_ref(x_nchw, w_oihw, stride, padding):
    return jax.lax.conv_general_dilated(
        x_nchw, w_oihw, window_strides=(stride, stride),
        padding=[(padding, padding), (padding, padding)],
        dimension_numbers=("NCHW", "OIHW", "NCHW"))


def basic_block_ref(x_nchw, params, *, stride):
    def bn(y, p):
        g, b, m, v = p
        s = g / jnp.sqrt(v + 1e-5)
        return y * s[None, :, None, None] + (b - m * s)[None, :, None, None]

    out = jnp.maximum(bn(_conv_ref(x_nchw, params["w1"], stride, 1), params["bn1"]), 0.0)
    out = bn(_conv_ref(out, params["w2"], 1, 1), params["bn2"])
    Cin, planes = params["w1"].shape[1], params["w1"].shape[0]
    if stride != 1 or Cin != planes:
        sc = bn(_conv_ref(x_nchw, params["w_sc"], stride, 0), params["bn_sc"])
    else:
        sc = x_nchw
    return jnp.maximum(out + sc, 0.0)


# ----------------------------------- main -------------------------------------

if __name__ == "__main__":
    key = jax.random.PRNGKey(0)

    def bn_params(c, off):
        return (0.5 + 0.05 * jnp.arange(c, dtype=jnp.float32) + off,    # gamma
                0.01 * jnp.arange(c, dtype=jnp.float32) - off,          # beta
                0.02 * jnp.arange(c, dtype=jnp.float32),                # running_mean
                1.0 + 0.03 * jnp.arange(c, dtype=jnp.float32))          # running_var

    def make_case(k, N, in_planes, planes, H, W, stride):
        k_x, k_w1, k_w2, k_wsc = jax.random.split(k, 4)
        x = jax.random.normal(k_x, (N, in_planes, H, W), dtype=jnp.float32)
        params = {
            "w1": 0.1 * jax.random.normal(k_w1, (planes, in_planes, 3, 3), jnp.float32),
            "bn1": bn_params(planes, 0.0),
            "w2": 0.1 * jax.random.normal(k_w2, (planes, planes, 3, 3), jnp.float32),
            "bn2": bn_params(planes, 0.1),
        }
        if stride != 1 or in_planes != planes:
            params["w_sc"] = 0.1 * jax.random.normal(
                k_wsc, (planes, in_planes, 1, 1), jnp.float32)
            params["bn_sc"] = bn_params(planes, 0.2)
        return x, params

    k1, k2 = jax.random.split(key)
    cases = [
        ("projection-shortcut", make_case(k1, 2, 4, 8, 16, 16, 2), 2),
        ("identity-shortcut",  make_case(k2, 2, 8, 8, 16, 16, 1), 1),
    ]

    for name, (x, params), stride in cases:
        fwd = jax.jit(functools.partial(basic_block_forward, stride=stride))
        out = jax.block_until_ready(fwd(x, params))
        ref = basic_block_ref(x, params, stride=stride)
        # bf16 MXU inputs (f32 accumulation/epilogue) -> relaxed tolerance.
        np.testing.assert_allclose(np.asarray(out), np.asarray(ref),
                                   rtol=2e-2, atol=2e-2, err_msg=name)

    print("KERNEL_OK")
</pallas_src>

<mosaic_0001>
module attributes {stable_mosaic.version = 11 : i64} {
  func.func @_mm_bias_kernel(%arg0: i32, %arg1: i32, %arg2: i32, %arg3: memref<128x128xbf16, #tpu.memory_space<vmem>>, %arg4: memref<128x128xbf16, #tpu.memory_space<vmem>>, %arg5: memref<1x128xf32, #tpu.memory_space<vmem>>, %arg6: memref<128x128xf32, #tpu.memory_space<vmem>>, %arg7: memref<128x128xf32, #tpu.memory_space<vmem>>) attributes {dimension_semantics = [#tpu.dimension_semantics<parallel>, #tpu.dimension_semantics<parallel>, #tpu.dimension_semantics<arbitrary>], iteration_bounds = array<i64: 1, 1, 1>, scalar_prefetch = 0 : i64, scratch_operands = 1 : i64, tpu.core_type = #tpu.core_type<tc>, window_params = [{transform_indices = @transform_0, window_bounds = array<i64: 128, 128>}, {transform_indices = @transform_1, window_bounds = array<i64: 128, 128>}, {transform_indices = @transform_2, window_bounds = array<i64: 1, 128>}, {transform_indices = @transform_3, window_bounds = array<i64: 128, 128>}]} {
    %c0_i32 = arith.constant 0 : i32
    %0 = arith.cmpi eq, %arg2, %c0_i32 : i32
    %1 = arith.extui %0 : i1 to i32
    %c0_i32_0 = arith.constant 0 : i32
    %2 = arith.cmpi ne, %1, %c0_i32_0 : i32
    scf.if %2 {
      %cst_10 = arith.constant 0.000000e+00 : f32
      %12 = vector.broadcast %cst_10 : f32 to vector<128x128xf32>
      %c0_11 = arith.constant 0 : index
      %c0_12 = arith.constant 0 : index
      %13 = vector.load %arg7[%c0_11, %c0_12] : memref<128x128xf32, #tpu.memory_space<vmem>>, vector<128x128xf32>
      tpu.vector_store %arg7[%c0_11, %c0_12], %12 {strides = array<i32>} : memref<128x128xf32, #tpu.memory_space<vmem>>, vector<128x128xf32>,
    } else {
    }
    %c0 = arith.constant 0 : index
    %c0_1 = arith.constant 0 : index
    %3 = vector.load %arg7[%c0, %c0_1] : memref<128x128xf32, #tpu.memory_space<vmem>>, vector<128x128xf32>
    %c0_2 = arith.constant 0 : index
    %c0_3 = arith.constant 0 : index
    %4 = vector.load %arg3[%c0_2, %c0_3] : memref<128x128xbf16, #tpu.memory_space<vmem>>, vector<128x128xbf16>
    %c0_4 = arith.constant 0 : index
    %c0_5 = arith.constant 0 : index
    %5 = vector.load %arg4[%c0_4, %c0_5] : memref<128x128xbf16, #tpu.memory_space<vmem>>, vector<128x128xbf16>
    %cst = arith.constant dense<0.000000e+00> : vector<128x128xf32>
    %6 = tpu.matmul %4, %5, %cst {dimension_numbers = #tpu.dot_dimension_numbers<[1], [0], [0], [1], [0, 0, 1, 1], [], []>} : vector<128x128xbf16>, vector<128x128xbf16>, vector<128x128xf32> -> vector<128x128xf32>
    %7 = arith.addf %3, %6 : vector<128x128xf32>
    %c0_6 = arith.constant 0 : index
    %c0_7 = arith.constant 0 : index
    %8 = vector.load %arg7[%c0_6, %c0_7] : memref<128x128xf32, #tpu.memory_space<vmem>>, vector<128x128xf32>
    tpu.vector_store %arg7[%c0_6, %c0_7], %7 {strides = array<i32>} : memref<128x128xf32, #tpu.memory_space<vmem>>, vector<128x128xf32>,
    %c0_i32_8 = arith.constant 0 : i32
    %9 = arith.cmpi eq, %arg2, %c0_i32_8 : i32
    %10 = arith.extui %9 : i1 to i32
    %c0_i32_9 = arith.constant 0 : i32
    %11 = arith.cmpi ne, %10, %c0_i32_9 : i32
    scf.if %11 {
      %c0_10 = arith.constant 0 : index
      %c0_11 = arith.constant 0 : index
      %12 = vector.load %arg7[%c0_10, %c0_11] : memref<128x128xf32, #tpu.memory_space<vmem>>, vector<128x128xf32>
      %c0_12 = arith.constant 0 : index
      %c0_13 = arith.constant 0 : index
      %13 = vector.load %arg5[%c0_12, %c0_13] : memref<1x128xf32, #tpu.memory_space<vmem>>, vector<1x128xf32>
      %14 = vector.broadcast %13 : vector<1x128xf32> to vector<128x128xf32>
      %15 = arith.addf %12, %14 : vector<128x128xf32>
      %cst_14 = arith.constant 0.000000e+00 : f32
      %16 = vector.broadcast %cst_14 : f32 to vector<128x128xf32>
      %17 = arith.maximumf %15, %16 : vector<128x128xf32>
      %c0_15 = arith.constant 0 : index
      %c0_16 = arith.constant 0 : index
      %18 = vector.load %arg6[%c0_15, %c0_16] : memref<128x128xf32, #tpu.memory_space<vmem>>, vector<128x128xf32>
      tpu.vector_store %arg6[%c0_15, %c0_16], %17 {strides = array<i32>} : memref<128x128xf32, #tpu.memory_space<vmem>>, vector<128x128xf32>,
    } else {
    }
    return
  }
  func.func @transform_0(%arg0: i32, %arg1: i32, %arg2: i32) -> (i32, i32) {
    %c0_i32 = arith.constant 0 : i32
    return %arg0, %arg2 : i32, i32
  }
  func.func @transform_1(%arg0: i32, %arg1: i32, %arg2: i32) -> (i32, i32) {
    %c0_i32 = arith.constant 0 : i32
    return %arg2, %arg1 : i32, i32
  }
  func.func @transform_2(%arg0: i32, %arg1: i32, %arg2: i32) -> (i32, i32) {
    %c0_i32 = arith.constant 0 : i32
    %c0_i32_0 = arith.constant 0 : i32
    return %c0_i32, %arg1 : i32, i32
  }
  func.func @transform_3(%arg0: i32, %arg1: i32, %arg2: i32) -> (i32, i32) {
    %c0_i32 = arith.constant 0 : i32
    return %arg0, %arg1 : i32, i32
  }
}

</mosaic_0001>

<llo_original>
// kernel: basic_block_forward.2
$region0: #{basic_block_forward.2}
  #allocation0 [shape = 'u32[]', space=smem, size = 0x4, offset = 0x4, fixed_abs, tag = 'smem constant byte address 0x4 - core index']
  #allocation1 [shape = 'u32[72,128]{1,0:T(1,128)}', space=vmem, size = 0x9000, scoped, tag = 'internal scratch']
  #allocation2 [shape = 'f32[128,128]{1,0:T(8,128)}', space=vmem, size = 0x10000, scoped, tag = 'scratch operand']
  %s0 = inlined_call_operand.vmem [shape: bf16[128,128], index: 0, kind: input, shape index: {}]
  %s1 = inlined_call_operand.vmem [shape: bf16[128,128], index: 1, kind: input, shape index: {}]
  %s2 = inlined_call_operand.vmem [shape: f32[1,128], index: 2, kind: input, shape index: {}]
  %s3 = inlined_call_operand.vmem [shape: f32[128,128], index: 3, kind: output, shape index: {}]
  %s4 = sld [smem:[#allocation0]]
  $region30: #{basic_block_forward.2} parent=0
    _
  %s6 = ssub.s32 1, %s4
  %s7 = scalar_select 0, %s6, %s4
  // Predicated region
  $region2: #{basic_block_forward.2} parent=0 // pred_check
    _
  $region3: #{basic_block_forward.2} parent=0 // pred_check_branch
    %9 = sbr.rel (0) target = $region5
  $region4: #{basic_block_forward.2} parent=0 // pred_region
    _
  $region5: #{basic_block_forward.2} parent=0 // pred_fallthru
    _
  // Predicated region
  $region6: #{basic_block_forward.2} parent=0 // pred_check
    _
  $region7: #{basic_block_forward.2} parent=0 // pred_check_branch
    %11 = sbr.rel (0) target = $region9
  $region8: #{basic_block_forward.2} parent=0 // pred_region
    _
  $region9: #{basic_block_forward.2} parent=0 // pred_fallthru
    _
  // Predicated region
  $region10: #{basic_block_forward.2} parent=0 // pred_check
    _
  $region11: #{basic_block_forward.2} parent=0 // pred_check_branch
    %13 = sbr.rel (0) target = $region13
  $region12: #{basic_block_forward.2} parent=0 // pred_region
    _
  $region13: #{basic_block_forward.2} parent=0 // pred_fallthru
    _
  %p14 = scmp.eq.s32.totalorder 0, 0
  // Predicated region
  $region14: #{basic_block_forward.2} parent=0 // pred_check
    %p15 = pneg %p14
  $region15: #{basic_block_forward.2} parent=0 // pred_check_branch
    %17 = sbr.rel (%p15) target = $region17
  $region16: #{basic_block_forward.2} parent=0 // pred_region
    %18 = vst [vmem:[#allocation2] sm:$0xff] 0.0
    %19 = vst [vmem:[#allocation2 + $0x8] sm:$0xff] 0.0
    %20 = vst [vmem:[#allocation2 + $0x10] sm:$0xff] 0.0
    %21 = vst [vmem:[#allocation2 + $0x18] sm:$0xff] 0.0
    %22 = vst [vmem:[#allocation2 + $0x20] sm:$0xff] 0.0
    %23 = vst [vmem:[#allocation2 + $0x28] sm:$0xff] 0.0
    %24 = vst [vmem:[#allocation2 + $0x30] sm:$0xff] 0.0
    %25 = vst [vmem:[#allocation2 + $0x38] sm:$0xff] 0.0
    %26 = vst [vmem:[#allocation2 + $0x40] sm:$0xff] 0.0
    %27 = vst [vmem:[#allocation2 + $0x48] sm:$0xff] 0.0
    %28 = vst [vmem:[#allocation2 + $0x50] sm:$0xff] 0.0
    %29 = vst [vmem:[#allocation2 + $0x58] sm:$0xff] 0.0
    %30 = vst [vmem:[#allocation2 + $0x60] sm:$0xff] 0.0
    %31 = vst [vmem:[#allocation2 + $0x68] sm:$0xff] 0.0
    %32 = vst [vmem:[#allocation2 + $0x70] sm:$0xff] 0.0
    %33 = vst [vmem:[#allocation2 + $0x78] sm:$0xff] 0.0
  $region17: #{basic_block_forward.2} parent=0 // pred_fallthru
    _
  %v34 = vld [vmem:[#allocation2] sm:$0xff]
  %v35 = vld [vmem:[#allocation2 + $0x8] sm:$0xff]
  %v36 = vld [vmem:[#allocation2 + $0x10] sm:$0xff]
  %v37 = vld [vmem:[#allocation2 + $0x18] sm:$0xff]
  %v38 = vld [vmem:[#allocation2 + $0x20] sm:$0xff]
  %v39 = vld [vmem:[#allocation2 + $0x28] sm:$0xff]
  %v40 = vld [vmem:[#allocation2 + $0x30] sm:$0xff]
  %v41 = vld [vmem:[#allocation2 + $0x38] sm:$0xff]
  %v42 = vld [vmem:[#allocation2 + $0x40] sm:$0xff]
  %v43 = vld [vmem:[#allocation2 + $0x48] sm:$0xff]
  %v44 = vld [vmem:[#allocation2 + $0x50] sm:$0xff]
  %v45 = vld [vmem:[#allocation2 + $0x58] sm:$0xff]
  %v46 = vld [vmem:[#allocation2 + $0x60] sm:$0xff]
  %v47 = vld [vmem:[#allocation2 + $0x68] sm:$0xff]
  %v48 = vld [vmem:[#allocation2 + $0x70] sm:$0xff]
  %v49 = vld [vmem:[#allocation2 + $0x78] sm:$0xff]
  %v50 = vld [vmem:[%s0] sm:$0xf]
  %v51 = vld [vmem:[%s0 + $0x4] sm:$0xf]
  %v52 = vld [vmem:[%s0 + $0x8] sm:$0xf]
  %v53 = vld [vmem:[%s0 + $0xc] sm:$0xf]
  %v54 = vld [vmem:[%s0 + $0x10] sm:$0xf]
  %v55 = vld [vmem:[%s0 + $0x14] sm:$0xf]
  %v56 = vld [vmem:[%s0 + $0x18] sm:$0xf]
  %v57 = vld [vmem:[%s0 + $0x1c] sm:$0xf]
  %v58 = vld [vmem:[%s0 + $0x20] sm:$0xf]
  %v59 = vld [vmem:[%s0 + $0x24] sm:$0xf]
  %v60 = vld [vmem:[%s0 + $0x28] sm:$0xf]
  %v61 = vld [vmem:[%s0 + $0x2c] sm:$0xf]
  %v62 = vld [vmem:[%s0 + $0x30] sm:$0xf]
  %v63 = vld [vmem:[%s0 + $0x34] sm:$0xf]
  %v64 = vld [vmem:[%s0 + $0x38] sm:$0xf]
  %v65 = vld [vmem:[%s0 + $0x3c] sm:$0xf]
  %v66 = vld [vmem:[%s1] sm:$0xf]
  %v67 = vld [vmem:[%s1 + $0x4] sm:$0xf]
  %v68 = vld [vmem:[%s1 + $0x8] sm:$0xf]
  %v69 = vld [vmem:[%s1 + $0xc] sm:$0xf]
  %v70 = vld [vmem:[%s1 + $0x10] sm:$0xf]
  %v71 = vld [vmem:[%s1 + $0x14] sm:$0xf]
  %v72 = vld [vmem:[%s1 + $0x18] sm:$0xf]
  %v73 = vld [vmem:[%s1 + $0x1c] sm:$0xf]
  %v74 = vld [vmem:[%s1 + $0x20] sm:$0xf]
  %v75 = vld [vmem:[%s1 + $0x24] sm:$0xf]
  %v76 = vld [vmem:[%s1 + $0x28] sm:$0xf]
  %v77 = vld [vmem:[%s1 + $0x2c] sm:$0xf]
  %v78 = vld [vmem:[%s1 + $0x30] sm:$0xf]
  %v79 = vld [vmem:[%s1 + $0x34] sm:$0xf]
  %v80 = vld [vmem:[%s1 + $0x38] sm:$0xf]
  %v81 = vld [vmem:[%s1 + $0x3c] sm:$0xf]
  %v98 = vunpack.c.l.b16 %v50
  %v99 = vunpack.c.l.b16 %v51
  %v100 = vunpack.c.l.b16 %v52
  %v101 = vunpack.c.l.b16 %v53
  %v102 = vunpack.c.l.b16 %v54
  %v103 = vunpack.c.l.b16 %v55
  %v104 = vunpack.c.l.b16 %v56
  %v105 = vunpack.c.l.b16 %v57
  %v106 = vunpack.c.l.b16 %v58
  %v107 = vunpack.c.l.b16 %v59
  %v108 = vunpack.c.l.b16 %v60
  %v109 = vunpack.c.l.b16 %v61
  %v110 = vunpack.c.l.b16 %v62
  %v111 = vunpack.c.l.b16 %v63
  %v112 = vunpack.c.l.b16 %v64
  %v113 = vunpack.c.l.b16 %v65
  %v114 = vpack.c.b16 %v99, %v98
  %v115 = vpack.c.b16 %v101, %v100
  %v116 = vpack.c.b16 %v103, %v102
  %v117 = vpack.c.b16 %v105, %v104
  %v118 = vpack.c.b16 %v107, %v106
  %v119 = vpack.c.b16 %v109, %v108
  %v120 = vpack.c.b16 %v111, %v110
  %v121 = vpack.c.b16 %v113, %v112
  %v146 = vunpack.c.l.b16 %v66
  %v147 = vunpack.c.l.b16 %v67
  %v148 = vunpack.c.l.b16 %v68
  %v149 = vunpack.c.l.b16 %v69
  %v150 = vunpack.c.l.b16 %v70
  %v151 = vunpack.c.l.b16 %v71
  %v152 = vunpack.c.l.b16 %v72
  %v153 = vunpack.c.l.b16 %v73
  %v154 = vunpack.c.l.b16 %v74
  %v155 = vunpack.c.l.b16 %v75
  %v156 = vunpack.c.l.b16 %v76
  %v157 = vunpack.c.l.b16 %v77
  %v158 = vunpack.c.l.b16 %v78
  %v159 = vunpack.c.l.b16 %v79
  %v160 = vunpack.c.l.b16 %v80
  %v161 = vunpack.c.l.b16 %v81
  %v162 = vpack.c.b16 %v147, %v146
  %v163 = vpack.c.b16 %v149, %v148
  %v164 = vpack.c.b16 %v151, %v150
  %v165 = vpack.c.b16 %v153, %v152
  %v166 = vpack.c.b16 %v155, %v154
  %v167 = vpack.c.b16 %v157, %v156
  %v168 = vpack.c.b16 %v159, %v158
  %v169 = vpack.c.b16 %v161, %v160
  %178 = vmatpush.bf16.msra.mxu0 %v169
  %179 = vmatpush.bf16.msra.mxu0 %v168
  %180 = vmatpush.bf16.msra.mxu0 %v167
  %181 = vmatpush.bf16.msra.mxu0 %v166
  %182 = vmatpush.bf16.msra.mxu0 %v165
  %183 = vmatpush.bf16.msra.mxu0 %v164
  %184 = vmatpush.bf16.msra.mxu0 %v163
  %185 = vmatpush.bf16.msra.mxu0 %v162
  %186 = vmatmul.bf16.gmra.mxu0 %v114
  %v187 = vpop.f32.mrf.mxu0
  %v188 = vadd.f32 0.0, %v187
  %v189 = vpop.f32.mrf.mxu0
  %v190 = vadd.f32 0.0, %v189
  %191 = vmatmul.bf16.gmra.mxu0 %v115
  %v192 = vpop.f32.mrf.mxu0
  %v193 = vadd.f32 0.0, %v192
  %v194 = vpop.f32.mrf.mxu0
  %v195 = vadd.f32 0.0, %v194
  %196 = vmatmul.bf16.gmra.mxu0 %v116
  %v197 = vpop.f32.mrf.mxu0
  %v198 = vadd.f32 0.0, %v197
  %v199 = vpop.f32.mrf.mxu0
  %v200 = vadd.f32 0.0, %v199
  %201 = vmatmul.bf16.gmra.mxu0 %v117
  %v202 = vpop.f32.mrf.mxu0
  %v203 = vadd.f32 0.0, %v202
  %v204 = vpop.f32.mrf.mxu0
  %v205 = vadd.f32 0.0, %v204
  %206 = vmatmul.bf16.gmra.mxu0 %v118
  %v207 = vpop.f32.mrf.mxu0
  %v208 = vadd.f32 0.0, %v207
  %v209 = vpop.f32.mrf.mxu0
  %v210 = vadd.f32 0.0, %v209
  %211 = vmatmul.bf16.gmra.mxu0 %v119
  %v212 = vpop.f32.mrf.mxu0
  %v213 = vadd.f32 0.0, %v212
  %v214 = vpop.f32.mrf.mxu0
  %v215 = vadd.f32 0.0, %v214
  %216 = vmatmul.bf16.gmra.mxu0 %v120
  %v217 = vpop.f32.mrf.mxu0
  %v218 = vadd.f32 0.0, %v217
  %v219 = vpop.f32.mrf.mxu0
  %v220 = vadd.f32 0.0, %v219
  %221 = vmatmul.bf16.gmra.mxu0 %v121
  %v222 = vpop.f32.mrf.mxu0
  %v223 = vadd.f32 0.0, %v222
  %v224 = vpop.f32.mrf.mxu0
  %v225 = vadd.f32 0.0, %v224
  %226 = vdwg.mxu0
  %v227 = vadd.f32 %v34, %v188
  %v228 = vadd.f32 %v35, %v190
  %v229 = vadd.f32 %v36, %v193
  %v230 = vadd.f32 %v37, %v195
  %v231 = vadd.f32 %v38, %v198
  %v232 = vadd.f32 %v39, %v200
  %v233 = vadd.f32 %v40, %v203
  %v234 = vadd.f32 %v41, %v205
  %v235 = vadd.f32 %v42, %v208
  %v236 = vadd.f32 %v43, %v210
  %v237 = vadd.f32 %v44, %v213
  %v238 = vadd.f32 %v45, %v215
  %v239 = vadd.f32 %v46, %v218
  %v240 = vadd.f32 %v47, %v220
  %v241 = vadd.f32 %v48, %v223
  %v242 = vadd.f32 %v49, %v225
  %243 = vst [vmem:[#allocation2] sm:$0xff] %v227
  %244 = vst [vmem:[#allocation2 + $0x8] sm:$0xff] %v228
  %245 = vst [vmem:[#allocation2 + $0x10] sm:$0xff] %v229
  %246 = vst [vmem:[#allocation2 + $0x18] sm:$0xff] %v230
  %247 = vst [vmem:[#allocation2 + $0x20] sm:$0xff] %v231
  %248 = vst [vmem:[#allocation2 + $0x28] sm:$0xff] %v232
  %249 = vst [vmem:[#allocation2 + $0x30] sm:$0xff] %v233
  %250 = vst [vmem:[#allocation2 + $0x38] sm:$0xff] %v234
  %251 = vst [vmem:[#allocation2 + $0x40] sm:$0xff] %v235
  %252 = vst [vmem:[#allocation2 + $0x48] sm:$0xff] %v236
  %253 = vst [vmem:[#allocation2 + $0x50] sm:$0xff] %v237
  %254 = vst [vmem:[#allocation2 + $0x58] sm:$0xff] %v238
  %255 = vst [vmem:[#allocation2 + $0x60] sm:$0xff] %v239
  %256 = vst [vmem:[#allocation2 + $0x68] sm:$0xff] %v240
  %257 = vst [vmem:[#allocation2 + $0x70] sm:$0xff] %v241
  %258 = vst [vmem:[#allocation2 + $0x78] sm:$0xff] %v242
  // Predicated region
  $region18: #{basic_block_forward.2} parent=0 // pred_check
    %p259 = pneg %p14
  $region19: #{basic_block_forward.2} parent=0 // pred_check_branch
    %261 = sbr.rel (%p259) target = $region21
  $region20: #{basic_block_forward.2} parent=0 // pred_region
    %v262 = vld [vmem:[#allocation2] sm:$0xff]
    %v263 = vld [vmem:[#allocation2 + $0x8] sm:$0xff]
    %v264 = vld [vmem:[#allocation2 + $0x10] sm:$0xff]
    %v265 = vld [vmem:[#allocation2 + $0x18] sm:$0xff]
    %v266 = vld [vmem:[#allocation2 + $0x20] sm:$0xff]
    %v267 = vld [vmem:[#allocation2 + $0x28] sm:$0xff]
    %v268 = vld [vmem:[#allocation2 + $0x30] sm:$0xff]
    %v269 = vld [vmem:[#allocation2 + $0x38] sm:$0xff]
    %v270 = vld [vmem:[#allocation2 + $0x40] sm:$0xff]
    %v271 = vld [vmem:[#allocation2 + $0x48] sm:$0xff]
    %v272 = vld [vmem:[#allocation2 + $0x50] sm:$0xff]
    %v273 = vld [vmem:[#allocation2 + $0x58] sm:$0xff]
    %v274 = vld [vmem:[#allocation2 + $0x60] sm:$0xff]
    %v275 = vld [vmem:[#allocation2 + $0x68] sm:$0xff]
    %v276 = vld [vmem:[#allocation2 + $0x70] sm:$0xff]
    %v277 = vld [vmem:[#allocation2 + $0x78] sm:$0xff]
    %v278 = vld [vmem:[%s2] sm:$0x1]
    %v280 = vperm.slane %v278, 0
    %v282 = vadd.f32 %v262, %v280
    %v283 = vadd.f32 %v263, %v280
    %v284 = vadd.f32 %v264, %v280
    %v285 = vadd.f32 %v265, %v280
    %v286 = vadd.f32 %v266, %v280
    %v287 = vadd.f32 %v267, %v280
    %v288 = vadd.f32 %v268, %v280
    %v289 = vadd.f32 %v269, %v280
    %v290 = vadd.f32 %v270, %v280
    %v291 = vadd.f32 %v271, %v280
    %v292 = vadd.f32 %v272, %v280
    %v293 = vadd.f32 %v273, %v280
    %v294 = vadd.f32 %v274, %v280
    %v295 = vadd.f32 %v275, %v280
    %v296 = vadd.f32 %v276, %v280
    %v297 = vadd.f32 %v277, %v280
    %v298 = vmax.f32 %v282, 0.0
    %v299 = vmax.f32 %v283, 0.0
    %v300 = vmax.f32 %v284, 0.0
    %v301 = vmax.f32 %v285, 0.0
    %v302 = vmax.f32 %v286, 0.0
    %v303 = vmax.f32 %v287, 0.0
    %v304 = vmax.f32 %v288, 0.0
    %v305 = vmax.f32 %v289, 0.0
    %v306 = vmax.f32 %v290, 0.0
    %v307 = vmax.f32 %v291, 0.0
    %v308 = vmax.f32 %v292, 0.0
    %v309 = vmax.f32 %v293, 0.0
    %v310 = vmax.f32 %v294, 0.0
    %v311 = vmax.f32 %v295, 0.0
    %v312 = vmax.f32 %v296, 0.0
    %v313 = vmax.f32 %v297, 0.0
    %314 = vst [vmem:[%s3] sm:$0xff] %v298
    %315 = vst [vmem:[%s3 + $0x8] sm:$0xff] %v299
    %316 = vst [vmem:[%s3 + $0x10] sm:$0xff] %v300
    %317 = vst [vmem:[%s3 + $0x18] sm:$0xff] %v301
    %318 = vst [vmem:[%s3 + $0x20] sm:$0xff] %v302
    %319 = vst [vmem:[%s3 + $0x28] sm:$0xff] %v303
    %320 = vst [vmem:[%s3 + $0x30] sm:$0xff] %v304
    %321 = vst [vmem:[%s3 + $0x38] sm:$0xff] %v305
    %322 = vst [vmem:[%s3 + $0x40] sm:$0xff] %v306
    %323 = vst [vmem:[%s3 + $0x48] sm:$0xff] %v307
    %324 = vst [vmem:[%s3 + $0x50] sm:$0xff] %v308
    %325 = vst [vmem:[%s3 + $0x58] sm:$0xff] %v309
    %326 = vst [vmem:[%s3 + $0x60] sm:$0xff] %v310
    %327 = vst [vmem:[%s3 + $0x68] sm:$0xff] %v311
    %328 = vst [vmem:[%s3 + $0x70] sm:$0xff] %v312
    %329 = vst [vmem:[%s3 + $0x78] sm:$0xff] %v313
  $region21: #{basic_block_forward.2} parent=0 // pred_fallthru
    _
  // Predicated region
  $region22: #{basic_block_forward.2} parent=0 // pred_check
    _
  $region23: #{basic_block_forward.2} parent=0 // pred_check_branch
    %331 = sbr.rel (0) target = $region25
  $region24: #{basic_block_forward.2} parent=0 // pred_region
    _
  $region25: #{basic_block_forward.2} parent=0 // pred_fallthru
    _
  // Predicated region
  $region26: #{basic_block_forward.2} parent=0 // pred_check
    _
  $region27: #{basic_block_forward.2} parent=0 // pred_check_branch
    %333 = sbr.rel (0) target = $region29
  $region28: #{basic_block_forward.2} parent=0 // pred_region
    _
  $region29: #{basic_block_forward.2} parent=0 // pred_fallthru
    _

</llo_original>
